<compile_context>
chip_gen: v5e
topology: v5e:2x2
jax: 0.10.0
libtpu: 0.0.40
codegen_flags: <defaults>
</compile_context>

<pallas_src>
import functools

import jax
import jax.numpy as jnp
from jax.experimental import pallas as pl
from jax.experimental.pallas import tpu as pltpu


def _round_up(x, m):
    return (x + m - 1) // m * m


# ----------------------------------------------------------------------------
# Kernel
# ----------------------------------------------------------------------------
def _double_conv_kernel(x_ref, mask_ref, w1_ref, b1_ref, w2_ref, b2_ref, o_ref,
                        *, img_w):
    """Fused [3x3 conv (pad=1, stride=1) + ReLU] x 2 on one batch block.

    x_ref:    (NB, Cin_p, Pp)    flat CHW activations (channels/lanes zero-padded)
    mask_ref: (9, NB*Pp)         0/1 tap-validity mask, image-major lane order
    w1_ref:   (Cout_p, 9*Cin_p)  im2col weights, column = (kh*3 + kw)*Cin_p + cin
    b1_ref:   (Cout_p, 1)        f32
    w2_ref:   (Cout_p, 9*Cout_p)
    b2_ref:   (Cout_p, 1)
    o_ref:    (NB, Cout, Pp)
    """
    nb = x_ref.shape[0]
    pp = x_ref.shape[2]
    lanes = nb * pp
    cout = o_ref.shape[1]

    # Static lane shifts for the 9 taps of a 3x3 / pad=1 / stride=1 conv.
    # NOTE: the roll+mask im2col is ONLY valid for this configuration — every
    # wrapped lane (within a row, across rows, across stacked images, into the
    # lane padding) is zeroed by the masks.
    shifts = tuple((-(dh * img_w + dw)) % lanes
                   for dh in (-1, 0, 1) for dw in (-1, 0, 1))

    masks = mask_ref[...]                      # (9, lanes), compute dtype, 0/1
    w1 = w1_ref[...]
    w2 = w2_ref[...]
    b1 = b1_ref[...].astype(jnp.float32)
    b2 = b2_ref[...].astype(jnp.float32)

    # (NB, C, Pp) -> channel-major slab (C, NB*Pp).  VMEM-only copies: lane
    # offsets are multiples of 128, sublanes are padded to multiples of 8.
    x_slab = jnp.concatenate([x_ref[n] for n in range(nb)], axis=1)

    def conv3x3_relu(z, w_mat, b_col):
        # ONE im2col matmul per layer per step: (Cout_p, 9C) @ (9C, NB*Pp).
        patches = []
        for t, shift in enumerate(shifts):
            shifted = z if shift == 0 else pltpu.roll(z, shift, 1)
            # Center tap (t == 4) is always in-image -> no mask multiply.
            patches.append(shifted if t == 4 else shifted * masks[t:t + 1, :])
        im2col = jnp.concatenate(patches, axis=0)          # (9*C, NB*Pp), aligned
        acc = jnp.dot(w_mat, im2col, preferred_element_type=jnp.float32)
        return jnp.maximum(acc + b_col, 0.0)               # one bias bcast / layer

    # TODO(synk): on v7x, split each layer into 3 K=3*C matmuls accumulating in
    # the MRB to drop the im2col concat and halve temporary VMEM for huge images.
    y1 = conv3x3_relu(x_slab, w1, b1).astype(x_slab.dtype)  # MXU-native dtype
    y2 = conv3x3_relu(y1, w2, b2)                           # (Cout_p, NB*Pp) f32

    for n in range(nb):                                     # lane-dense stores
        o_ref[n] = y2[:cout, n * pp:(n + 1) * pp].astype(o_ref.dtype)


# ----------------------------------------------------------------------------
# Host-side helpers
# ----------------------------------------------------------------------------
def _tap_masks(h, w, pp, dtype):
    """(9, Pp) 0/1 masks: 1 where the 3x3 tap reads a valid (in-image) pixel
    after the flat-index roll; 0 on image edges and in the lane padding."""
    p = h * w
    hh = jnp.arange(h).reshape(h, 1)
    ww = jnp.arange(w).reshape(1, w)
    rows = []
    for kh in range(3):
        for kw in range(3):
            dh, dw = kh - 1, kw - 1
            valid = ((hh + dh >= 0) & (hh + dh < h) &
                     (ww + dw >= 0) & (ww + dw < w)).reshape(-1)
            rows.append(jnp.pad(valid, (0, pp - p)))
    return jnp.stack(rows, axis=0).astype(dtype)


def _pack_weights(w_oihw, cin_pad, cout_pad):
    """OIHW -> (Cout_p, 9*Cin_p) im2col matrix, zero-padded to aligned channel
    counts; column order (kh*3 + kw)*Cin_p + cin matches the kernel's taps."""
    cout, cin, _, _ = w_oihw.shape
    w = jnp.transpose(w_oihw, (0, 2, 3, 1))                 # (cout, kh, kw, cin)
    w = jnp.pad(w, ((0, cout_pad - cout), (0, 0), (0, 0), (0, cin_pad - cin)))
    return w.reshape(cout_pad, 9 * cin_pad)


def _step_vmem_bytes(nb, *, cin_p, cout_p, cout, pp, itemsize):
    """Rough per-grid-step VMEM footprint (double-buffered I/O + temporaries)."""
    lanes = nb * pp
    io = 2 * (nb * cin_p * pp + nb * cout * pp) * itemsize
    const = (9 * lanes + 9 * cout_p * (cin_p + cout_p) + 2 * cout_p) * itemsize
    tmp = (cin_p + 9 * cin_p + 9 * cout_p) * lanes * itemsize   # slab + im2cols
    tmp += 2 * cout_p * lanes * 4                               # f32 accumulators
    return io + const + tmp


def _vmem_budget_bytes():
    try:
        cap = pltpu.get_tpu_info().vmem_capacity_bytes
    except Exception:
        cap = 64 * 1024 * 1024          # conservative (v7x per-TC VMEM)
    return (cap * 3) // 4


def _num_tensorcores():
    try:
        kind = jax.devices()[0].device_kind.lower()
    except Exception:
        return 1
    return 2 if "v7" in kind else 1     # v7x: 2 TCs/chip; v5e/v6e: 1


def _pick_batch_block(n, budget, footprint_fn, num_tc):
    divisors = [d for d in range(1, n + 1) if n % d == 0]
    fitting = [d for d in divisors if footprint_fn(d) <= budget] or [1]
    if num_tc >= 2 and n >= 2:
        # Keep >=2 "parallel" grid steps so both TensorCores get work (v7x).
        two_step = [d for d in fitting if n // d >= 2]
        if two_step:
            return max(two_step)
    # Single-TC chips (v5e/v6e): fewest, fattest steps that fit VMEM.
    return max(fitting)


# ----------------------------------------------------------------------------
# Wrapper
# ----------------------------------------------------------------------------
def double_convolution(x_nchw, w1_mat, b1_col, w2_mat, b2_col, out_channels):
    """[Conv2d(3x3, pad=1) + ReLU] x 2, fused into one Pallas call. NCHW in/out."""
    n, cin, h, w = x_nchw.shape
    p = h * w
    pp = _round_up(p, 128)                  # lane-dense blocks / unmasked stores
    cin_p = w1_mat.shape[1] // 9            # sublane-padded input channels
    cout_p = w1_mat.shape[0]
    dtype = x_nchw.dtype
    itemsize = jnp.dtype(dtype).itemsize

    # Contiguous reshape + cheap zero-padding to aligned channel/lane counts.
    x_flat = x_nchw.reshape(n, cin, p)
    x_pad = jnp.pad(x_flat, ((0, 0), (0, cin_p - cin), (0, pp - p)))

    budget = _vmem_budget_bytes()
    fp = functools.partial(_step_vmem_bytes, cin_p=cin_p, cout_p=cout_p,
                           cout=out_channels, pp=pp, itemsize=itemsize)
    nb = _pick_batch_block(n, budget, fp, _num_tensorcores())

    masks = jnp.tile(_tap_masks(h, w, pp, dtype), (1, nb))      # (9, nb*pp)
    kernel = functools.partial(_double_conv_kernel, img_w=w)
    vmem_limit = int(min(budget, max(32 * 1024 * 1024, 2 * fp(nb))))

    out = pl.pallas_call(
        kernel,
        out_shape=jax.ShapeDtypeStruct((n, out_channels, pp), dtype),
        grid=(n // nb,),
        in_specs=[
            pl.BlockSpec((nb, cin_p, pp), lambda i: (i, 0, 0)),
            pl.BlockSpec((9, nb * pp), lambda i: (0, 0)),
            pl.BlockSpec(w1_mat.shape, lambda i: (0, 0)),
            pl.BlockSpec(b1_col.shape, lambda i: (0, 0)),
            pl.BlockSpec(w2_mat.shape, lambda i: (0, 0)),
            pl.BlockSpec(b2_col.shape, lambda i: (0, 0)),
        ],
        out_specs=pl.BlockSpec((nb, out_channels, pp), lambda i: (i, 0, 0)),
        compiler_params=pltpu.CompilerParams(
            dimension_semantics=("parallel",),
            vmem_limit_bytes=vmem_limit),
    )(x_pad, masks, w1_mat.astype(dtype), b1_col, w2_mat.astype(dtype), b2_col)

    # TODO(synk): for very large H*W*Cout on v7x (64 MiB VMEM), add a second
    # grid axis over H row-strips with a 1-row halo instead of whole images.
    return out[:, :, :p].reshape(n, out_channels, h, w)


class DoubleConvolutionPallas:
    """Pallas equivalent of PyTorch DoubleConvolution with default kwargs:
       [Conv2d(Cin, Cout, 3, pad=1), ReLU, Conv2d(Cout, Cout, 3, pad=1), ReLU]."""

    def __init__(self, in_channels, out_channels, key):
        k1, k2, k3, k4 = jax.random.split(key, 4)
        # Deterministic synthetic init (PyTorch default is kaiming-uniform; we
        # only need deterministic, correctly-shaped params).
        w1_oihw = jax.random.normal(k1, (out_channels, in_channels, 3, 3),
                                    jnp.float32) / jnp.sqrt(9.0 * in_channels)
        b1 = jax.random.normal(k2, (out_channels,), jnp.float32) * 0.01
        w2_oihw = jax.random.normal(k3, (out_channels, out_channels, 3, 3),
                                    jnp.float32) / jnp.sqrt(9.0 * out_channels)
        b2 = jax.random.normal(k4, (out_channels,), jnp.float32) * 0.01

        self.in_channels, self.out_channels = in_channels, out_channels
        self.w1_oihw, self.b1, self.w2_oihw, self.b2 = w1_oihw, b1, w2_oihw, b2

        cin_p = _round_up(in_channels, 8)        # sublane-align the im2col
        cout_p = _round_up(out_channels, 8)
        self.w1_mat = _pack_weights(w1_oihw, cin_p, cout_p)
        self.w2_mat = _pack_weights(w2_oihw, cout_p, cout_p)
        self.b1_col = jnp.pad(b1, (0, cout_p - out_channels)).reshape(cout_p, 1)
        self.b2_col = jnp.pad(b2, (0, cout_p - out_channels)).reshape(cout_p, 1)

    def __call__(self, x_nchw):
        return double_convolution(x_nchw, self.w1_mat, self.b1_col,
                                  self.w2_mat, self.b2_col, self.out_channels)


def _reference(x_nchw, mod):
    """Pure-JAX reference using lax.conv_general_dilated (NCHW/OIHW)."""
    def conv(x, w_oihw, b):
        y = jax.lax.conv_general_dilated(
            x, w_oihw, window_strides=(1, 1), padding=((1, 1), (1, 1)),
            dimension_numbers=("NCHW", "OIHW", "NCHW"))
        return jnp.maximum(y + b[None, :, None, None], 0.0)
    y = conv(x_nchw, mod.w1_oihw, mod.b1)
    return conv(y, mod.w2_oihw, mod.b2)


if __name__ == "__main__":
    key = jax.random.PRNGKey(0)
    k_x, k_p = jax.random.split(key)

    in_channels, out_channels = 4, 8
    x = jax.random.normal(k_x, (2, in_channels, 16, 16), jnp.float32)

    mod = DoubleConvolutionPallas(in_channels, out_channels, k_p)

    out = jax.block_until_ready(mod(x))
    ref = _reference(x, mod)

    assert out.shape == (2, out_channels, 16, 16), out.shape
    assert jnp.allclose(out, ref, atol=1e-4, rtol=1e-4), "mismatch vs reference"

    print("KERNEL_OK")
</pallas_src>

<mosaic_0001>
module attributes {stable_mosaic.version = 11 : i64} {
  func.func @_double_conv_kernel(%arg0: i32, %arg1: memref<2x8x256xf32, #tpu.memory_space<vmem>>, %arg2: memref<9x512xf32, #tpu.memory_space<vmem>>, %arg3: memref<8x72xf32, #tpu.memory_space<vmem>>, %arg4: memref<8x1xf32, #tpu.memory_space<vmem>>, %arg5: memref<8x72xf32, #tpu.memory_space<vmem>>, %arg6: memref<8x1xf32, #tpu.memory_space<vmem>>, %arg7: memref<2x8x256xf32, #tpu.memory_space<vmem>>) attributes {dimension_semantics = [#tpu.dimension_semantics<parallel>], iteration_bounds = array<i64: 1>, scalar_prefetch = 0 : i64, scratch_operands = 0 : i64, tpu.core_type = #tpu.core_type<tc>, window_params = [{transform_indices = @transform_0, window_bounds = array<i64: 2, 8, 256>}, {pipeline_mode = #tpu.pipeline_mode<synchronous>, transform_indices = @transform_1, window_bounds = array<i64: 9, 512>}, {pipeline_mode = #tpu.pipeline_mode<synchronous>, transform_indices = @transform_2, window_bounds = array<i64: 8, 72>}, {pipeline_mode = #tpu.pipeline_mode<synchronous>, transform_indices = @transform_3, window_bounds = array<i64: 8, 1>}, {pipeline_mode = #tpu.pipeline_mode<synchronous>, transform_indices = @transform_4, window_bounds = array<i64: 8, 72>}, {pipeline_mode = #tpu.pipeline_mode<synchronous>, transform_indices = @transform_5, window_bounds = array<i64: 8, 1>}, {transform_indices = @transform_6, window_bounds = array<i64: 2, 8, 256>}]} {
    %c0 = arith.constant 0 : index
    %c0_0 = arith.constant 0 : index
    %0 = vector.load %arg2[%c0, %c0_0] : memref<9x512xf32, #tpu.memory_space<vmem>>, vector<9x512xf32>
    %c0_1 = arith.constant 0 : index
    %c0_2 = arith.constant 0 : index
    %1 = vector.load %arg3[%c0_1, %c0_2] : memref<8x72xf32, #tpu.memory_space<vmem>>, vector<8x72xf32>
    %c0_3 = arith.constant 0 : index
    %c0_4 = arith.constant 0 : index
    %2 = vector.load %arg5[%c0_3, %c0_4] : memref<8x72xf32, #tpu.memory_space<vmem>>, vector<8x72xf32>
    %c0_5 = arith.constant 0 : index
    %c0_6 = arith.constant 0 : index
    %3 = vector.load %arg4[%c0_5, %c0_6] : memref<8x1xf32, #tpu.memory_space<vmem>>, vector<8x1xf32>
    %c0_7 = arith.constant 0 : index
    %c0_8 = arith.constant 0 : index
    %4 = vector.load %arg6[%c0_7, %c0_8] : memref<8x1xf32, #tpu.memory_space<vmem>>, vector<8x1xf32>
    %c0_9 = arith.constant 0 : index
    %c0_10 = arith.constant 0 : index
    %c0_11 = arith.constant 0 : index
    %5 = vector.load %arg1[%c0_9, %c0_10, %c0_11] : memref<2x8x256xf32, #tpu.memory_space<vmem>>, vector<1x8x256xf32>
    %6 = vector.shape_cast %5 : vector<1x8x256xf32> to vector<8x256xf32>
    %c1 = arith.constant 1 : index
    %c0_12 = arith.constant 0 : index
    %c0_13 = arith.constant 0 : index
    %7 = vector.load %arg1[%c1, %c0_12, %c0_13] : memref<2x8x256xf32, #tpu.memory_space<vmem>>, vector<1x8x256xf32>
    %8 = vector.shape_cast %7 : vector<1x8x256xf32> to vector<8x256xf32>
    %9 = tpu.concatenate %6, %8 in 1 : vector<8x256xf32>, vector<8x256xf32> -> vector<8x512xf32>
    %c17_i32 = arith.constant 17 : i32
    %10 = tpu.dynamic_rotate %9 by %c17_i32 dim 1 : vector<8x512xf32>, i32 -> vector<8x512xf32>
    %11 = vector.extract_strided_slice %0 {offsets = [0, 0], sizes = [1, 512], strides = [1, 1]} : vector<9x512xf32> to vector<1x512xf32>
    %12 = vector.broadcast %11 : vector<1x512xf32> to vector<8x512xf32>
    %13 = arith.mulf %10, %12 : vector<8x512xf32>
    %c16_i32 = arith.constant 16 : i32
    %14 = tpu.dynamic_rotate %9 by %c16_i32 dim 1 : vector<8x512xf32>, i32 -> vector<8x512xf32>
    %15 = vector.extract_strided_slice %0 {offsets = [1, 0], sizes = [1, 512], strides = [1, 1]} : vector<9x512xf32> to vector<1x512xf32>
    %16 = vector.broadcast %15 : vector<1x512xf32> to vector<8x512xf32>
    %17 = arith.mulf %14, %16 : vector<8x512xf32>
    %c15_i32 = arith.constant 15 : i32
    %18 = tpu.dynamic_rotate %9 by %c15_i32 dim 1 : vector<8x512xf32>, i32 -> vector<8x512xf32>
    %19 = vector.extract_strided_slice %0 {offsets = [2, 0], sizes = [1, 512], strides = [1, 1]} : vector<9x512xf32> to vector<1x512xf32>
    %20 = vector.broadcast %19 : vector<1x512xf32> to vector<8x512xf32>
    %21 = arith.mulf %18, %20 : vector<8x512xf32>
    %c1_i32 = arith.constant 1 : i32
    %22 = tpu.dynamic_rotate %9 by %c1_i32 dim 1 : vector<8x512xf32>, i32 -> vector<8x512xf32>
    %23 = vector.extract_strided_slice %0 {offsets = [3, 0], sizes = [1, 512], strides = [1, 1]} : vector<9x512xf32> to vector<1x512xf32>
    %24 = vector.broadcast %23 : vector<1x512xf32> to vector<8x512xf32>
    %25 = arith.mulf %22, %24 : vector<8x512xf32>
    %c511_i32 = arith.constant 511 : i32
    %26 = tpu.dynamic_rotate %9 by %c511_i32 dim 1 : vector<8x512xf32>, i32 -> vector<8x512xf32>
    %27 = vector.extract_strided_slice %0 {offsets = [5, 0], sizes = [1, 512], strides = [1, 1]} : vector<9x512xf32> to vector<1x512xf32>
    %28 = vector.broadcast %27 : vector<1x512xf32> to vector<8x512xf32>
    %29 = arith.mulf %26, %28 : vector<8x512xf32>
    %c497_i32 = arith.constant 497 : i32
    %30 = tpu.dynamic_rotate %9 by %c497_i32 dim 1 : vector<8x512xf32>, i32 -> vector<8x512xf32>
    %31 = vector.extract_strided_slice %0 {offsets = [6, 0], sizes = [1, 512], strides = [1, 1]} : vector<9x512xf32> to vector<1x512xf32>
    %32 = vector.broadcast %31 : vector<1x512xf32> to vector<8x512xf32>
    %33 = arith.mulf %30, %32 : vector<8x512xf32>
    %c496_i32 = arith.constant 496 : i32
    %34 = tpu.dynamic_rotate %9 by %c496_i32 dim 1 : vector<8x512xf32>, i32 -> vector<8x512xf32>
    %35 = vector.extract_strided_slice %0 {offsets = [7, 0], sizes = [1, 512], strides = [1, 1]} : vector<9x512xf32> to vector<1x512xf32>
    %36 = vector.broadcast %35 : vector<1x512xf32> to vector<8x512xf32>
    %37 = arith.mulf %34, %36 : vector<8x512xf32>
    %c495_i32 = arith.constant 495 : i32
    %38 = tpu.dynamic_rotate %9 by %c495_i32 dim 1 : vector<8x512xf32>, i32 -> vector<8x512xf32>
    %39 = vector.extract_strided_slice %0 {offsets = [8, 0], sizes = [1, 512], strides = [1, 1]} : vector<9x512xf32> to vector<1x512xf32>
    %40 = vector.broadcast %39 : vector<1x512xf32> to vector<8x512xf32>
    %41 = arith.mulf %38, %40 : vector<8x512xf32>
    %42 = tpu.concatenate %13, %17, %21, %25, %9, %29, %33, %37, %41 in 0 : vector<8x512xf32>, vector<8x512xf32>, vector<8x512xf32>, vector<8x512xf32>, vector<8x512xf32>, vector<8x512xf32>, vector<8x512xf32>, vector<8x512xf32>, vector<8x512xf32> -> vector<72x512xf32>
    %cst = arith.constant dense<0.000000e+00> : vector<8x512xf32>
    %43 = tpu.matmul %1, %42, %cst {dimension_numbers = #tpu.dot_dimension_numbers<[1], [0], [0], [1], [0, 0, 1, 1], [], []>} : vector<8x72xf32>, vector<72x512xf32>, vector<8x512xf32> -> vector<8x512xf32>
    %44 = vector.broadcast %3 : vector<8x1xf32> to vector<8x512xf32>
    %45 = arith.addf %43, %44 : vector<8x512xf32>
    %cst_14 = arith.constant 0.000000e+00 : f32
    %46 = vector.broadcast %cst_14 : f32 to vector<8x512xf32>
    %47 = arith.maximumf %45, %46 : vector<8x512xf32>
    %c17_i32_15 = arith.constant 17 : i32
    %48 = tpu.dynamic_rotate %47 by %c17_i32_15 dim 1 : vector<8x512xf32>, i32 -> vector<8x512xf32>
    %49 = vector.extract_strided_slice %0 {offsets = [0, 0], sizes = [1, 512], strides = [1, 1]} : vector<9x512xf32> to vector<1x512xf32>
    %50 = vector.broadcast %49 : vector<1x512xf32> to vector<8x512xf32>
    %51 = arith.mulf %48, %50 : vector<8x512xf32>
    %c16_i32_16 = arith.constant 16 : i32
    %52 = tpu.dynamic_rotate %47 by %c16_i32_16 dim 1 : vector<8x512xf32>, i32 -> vector<8x512xf32>
    %53 = vector.extract_strided_slice %0 {offsets = [1, 0], sizes = [1, 512], strides = [1, 1]} : vector<9x512xf32> to vector<1x512xf32>
    %54 = vector.broadcast %53 : vector<1x512xf32> to vector<8x512xf32>
    %55 = arith.mulf %52, %54 : vector<8x512xf32>
    %c15_i32_17 = arith.constant 15 : i32
    %56 = tpu.dynamic_rotate %47 by %c15_i32_17 dim 1 : vector<8x512xf32>, i32 -> vector<8x512xf32>
    %57 = vector.extract_strided_slice %0 {offsets = [2, 0], sizes = [1, 512], strides = [1, 1]} : vector<9x512xf32> to vector<1x512xf32>
    %58 = vector.broadcast %57 : vector<1x512xf32> to vector<8x512xf32>
    %59 = arith.mulf %56, %58 : vector<8x512xf32>
    %c1_i32_18 = arith.constant 1 : i32
    %60 = tpu.dynamic_rotate %47 by %c1_i32_18 dim 1 : vector<8x512xf32>, i32 -> vector<8x512xf32>
    %61 = vector.extract_strided_slice %0 {offsets = [3, 0], sizes = [1, 512], strides = [1, 1]} : vector<9x512xf32> to vector<1x512xf32>
    %62 = vector.broadcast %61 : vector<1x512xf32> to vector<8x512xf32>
    %63 = arith.mulf %60, %62 : vector<8x512xf32>
    %c511_i32_19 = arith.constant 511 : i32
    %64 = tpu.dynamic_rotate %47 by %c511_i32_19 dim 1 : vector<8x512xf32>, i32 -> vector<8x512xf32>
    %65 = vector.extract_strided_slice %0 {offsets = [5, 0], sizes = [1, 512], strides = [1, 1]} : vector<9x512xf32> to vector<1x512xf32>
    %66 = vector.broadcast %65 : vector<1x512xf32> to vector<8x512xf32>
    %67 = arith.mulf %64, %66 : vector<8x512xf32>
    %c497_i32_20 = arith.constant 497 : i32
    %68 = tpu.dynamic_rotate %47 by %c497_i32_20 dim 1 : vector<8x512xf32>, i32 -> vector<8x512xf32>
    %69 = vector.extract_strided_slice %0 {offsets = [6, 0], sizes = [1, 512], strides = [1, 1]} : vector<9x512xf32> to vector<1x512xf32>
    %70 = vector.broadcast %69 : vector<1x512xf32> to vector<8x512xf32>
    %71 = arith.mulf %68, %70 : vector<8x512xf32>
    %c496_i32_21 = arith.constant 496 : i32
    %72 = tpu.dynamic_rotate %47 by %c496_i32_21 dim 1 : vector<8x512xf32>, i32 -> vector<8x512xf32>
    %73 = vector.extract_strided_slice %0 {offsets = [7, 0], sizes = [1, 512], strides = [1, 1]} : vector<9x512xf32> to vector<1x512xf32>
    %74 = vector.broadcast %73 : vector<1x512xf32> to vector<8x512xf32>
    %75 = arith.mulf %72, %74 : vector<8x512xf32>
    %c495_i32_22 = arith.constant 495 : i32
    %76 = tpu.dynamic_rotate %47 by %c495_i32_22 dim 1 : vector<8x512xf32>, i32 -> vector<8x512xf32>
    %77 = vector.extract_strided_slice %0 {offsets = [8, 0], sizes = [1, 512], strides = [1, 1]} : vector<9x512xf32> to vector<1x512xf32>
    %78 = vector.broadcast %77 : vector<1x512xf32> to vector<8x512xf32>
    %79 = arith.mulf %76, %78 : vector<8x512xf32>
    %80 = tpu.concatenate %51, %55, %59, %63, %47, %67, %71, %75, %79 in 0 : vector<8x512xf32>, vector<8x512xf32>, vector<8x512xf32>, vector<8x512xf32>, vector<8x512xf32>, vector<8x512xf32>, vector<8x512xf32>, vector<8x512xf32>, vector<8x512xf32> -> vector<72x512xf32>
    %cst_23 = arith.constant dense<0.000000e+00> : vector<8x512xf32>
    %81 = tpu.matmul %2, %80, %cst_23 {dimension_numbers = #tpu.dot_dimension_numbers<[1], [0], [0], [1], [0, 0, 1, 1], [], []>} : vector<8x72xf32>, vector<72x512xf32>, vector<8x512xf32> -> vector<8x512xf32>
    %82 = vector.broadcast %4 : vector<8x1xf32> to vector<8x512xf32>
    %83 = arith.addf %81, %82 : vector<8x512xf32>
    %cst_24 = arith.constant 0.000000e+00 : f32
    %84 = vector.broadcast %cst_24 : f32 to vector<8x512xf32>
    %85 = arith.maximumf %83, %84 : vector<8x512xf32>
    %86 = vector.extract_strided_slice %85 {offsets = [0, 0], sizes = [8, 256], strides = [1, 1]} : vector<8x512xf32> to vector<8x256xf32>
    %c0_25 = arith.constant 0 : index
    %c0_26 = arith.constant 0 : index
    %c0_27 = arith.constant 0 : index
    %87 = vector.load %arg7[%c0_25, %c0_26, %c0_27] : memref<2x8x256xf32, #tpu.memory_space<vmem>>, vector<1x8x256xf32>
    %88 = vector.shape_cast %87 : vector<1x8x256xf32> to vector<8x256xf32>
    %89 = vector.shape_cast %86 : vector<8x256xf32> to vector<1x8x256xf32>
    tpu.vector_store %arg7[%c0_25, %c0_26, %c0_27], %89 {strides = array<i32>} : memref<2x8x256xf32, #tpu.memory_space<vmem>>, vector<1x8x256xf32>,
    %90 = vector.extract_strided_slice %85 {offsets = [0, 256], sizes = [8, 256], strides = [1, 1]} : vector<8x512xf32> to vector<8x256xf32>
    %c1_28 = arith.constant 1 : index
    %c0_29 = arith.constant 0 : index
    %c0_30 = arith.constant 0 : index
    %91 = vector.load %arg7[%c1_28, %c0_29, %c0_30] : memref<2x8x256xf32, #tpu.memory_space<vmem>>, vector<1x8x256xf32>
    %92 = vector.shape_cast %91 : vector<1x8x256xf32> to vector<8x256xf32>
    %93 = vector.shape_cast %90 : vector<8x256xf32> to vector<1x8x256xf32>
    tpu.vector_store %arg7[%c1_28, %c0_29, %c0_30], %93 {strides = array<i32>} : memref<2x8x256xf32, #tpu.memory_space<vmem>>, vector<1x8x256xf32>,
    return
  }
  func.func @transform_0(%arg0: i32) -> (i32, i32, i32) {
    %c0_i32 = arith.constant 0 : i32
    %c0_i32_0 = arith.constant 0 : i32
    %c0_i32_1 = arith.constant 0 : i32
    return %arg0, %c0_i32, %c0_i32_0 : i32, i32, i32
  }
  func.func @transform_1(%arg0: i32) -> (i32, i32) {
    %c0_i32 = arith.constant 0 : i32
    %c0_i32_0 = arith.constant 0 : i32
    %c0_i32_1 = arith.constant 0 : i32
    return %c0_i32, %c0_i32_0 : i32, i32
  }
  func.func @transform_2(%arg0: i32) -> (i32, i32) {
    %c0_i32 = arith.constant 0 : i32
    %c0_i32_0 = arith.constant 0 : i32
    %c0_i32_1 = arith.constant 0 : i32
    return %c0_i32, %c0_i32_0 : i32, i32
  }
  func.func @transform_3(%arg0: i32) -> (i32, i32) {
    %c0_i32 = arith.constant 0 : i32
    %c0_i32_0 = arith.constant 0 : i32
    %c0_i32_1 = arith.constant 0 : i32
    return %c0_i32, %c0_i32_0 : i32, i32
  }
  func.func @transform_4(%arg0: i32) -> (i32, i32) {
    %c0_i32 = arith.constant 0 : i32
    %c0_i32_0 = arith.constant 0 : i32
    %c0_i32_1 = arith.constant 0 : i32
    return %c0_i32, %c0_i32_0 : i32, i32
  }
  func.func @transform_5(%arg0: i32) -> (i32, i32) {
    %c0_i32 = arith.constant 0 : i32
    %c0_i32_0 = arith.constant 0 : i32
    %c0_i32_1 = arith.constant 0 : i32
    return %c0_i32, %c0_i32_0 : i32, i32
  }
  func.func @transform_6(%arg0: i32) -> (i32, i32, i32) {
    %c0_i32 = arith.constant 0 : i32
    %c0_i32_0 = arith.constant 0 : i32
    %c0_i32_1 = arith.constant 0 : i32
    return %arg0, %c0_i32, %c0_i32_0 : i32, i32, i32
  }
}

</mosaic_0001>

<llo_original>
// kernel: tpu_custom_call.1
$region0: #{tpu_custom_call.1}
  #allocation0 [shape = 'u32[]', space=smem, size = 0x4, offset = 0x4, fixed_abs, tag = 'smem constant byte address 0x4 - core index']
  #allocation1 [shape = 'u32[72,128]{1,0:T(1,128)}', space=vmem, size = 0x9000, scoped, tag = 'internal scratch']
  %s0 = inlined_call_operand.hbm [shape: f32[2,8,256], index: 0, kind: input, shape index: {}]
  %s1 = inlined_call_operand.hbm [shape: f32[9,512], index: 1, kind: input, shape index: {}]
  %s2 = inlined_call_operand.vmem [shape: f32[8,72], index: 2, kind: input, shape index: {}]
  %s3 = inlined_call_operand.vmem [shape: f32[8,1], index: 3, kind: input, shape index: {}]
  %s4 = inlined_call_operand.vmem [shape: f32[8,72], index: 4, kind: input, shape index: {}]
  %s5 = inlined_call_operand.vmem [shape: f32[8,1], index: 5, kind: input, shape index: {}]
  %s6 = inlined_call_operand.hbm [shape: f32[2,8,256], index: 6, kind: output, shape index: {}]
  %s7 = sld [smem:[#allocation0]]
  $region42: #{tpu_custom_call.1} parent=0
    _
  %s9 = ssub.s32 1, %s7
  %s10 = scalar_select 0, %s9, %s7
  $region1: #{tpu_custom_call.1} parent=0
    #allocation2 [shape = 'u8[16384]{0}', space=vmem, size = 0x4000, scoped, tag = 'input window, operand 0, single buffered']
    #allocation3 [shape = 's32[1]{0}', space=sflag, size = 0x4, scoped, tag = 'scoped memory for tpu_custom_call.1']
    #allocation4 [shape = 's32[1]{0}', space=sflag, size = 0x4, scoped, tag = 'scoped memory for tpu_custom_call.1']
    #allocation5 [shape = 'u8[32768]{0}', space=vmem, size = 0x8000, scoped, tag = 'input window, operand 1, single buffered']
    #allocation6 [shape = 's32[1]{0}', space=sflag, size = 0x4, scoped, tag = 'scoped memory for tpu_custom_call.1']
    #allocation7 [shape = 'u8[16384]{0}', space=vmem, size = 0x4000, scoped, tag = 'output window, operand 0, single buffered']
    %11 = vsyncpa [#allocation3], 0
    %12 = vsyncpa [#allocation6], 0
    %13 = vsyncpa [#allocation4], 0
    // Predicated region
    $region2: #{tpu_custom_call.1} parent=1 // pred_check
      _
    $region3: #{tpu_custom_call.1} parent=1 // pred_check_branch
      %15 = sbr.rel (0) target = $region5
    $region4: #{tpu_custom_call.1} parent=1 // pred_region
      %17 = vsyncadd [#allocation3], 0
      %s18 = sshll.u32 %s0, 4
      %s19 = int_to_ptr.hbm [resolvable:$true] %s18
      %s20 = sshll.u32 [#allocation2], 4
      %s21 = int_to_ptr.vmem [resolvable:$true] %s20
      %26 = dma.hbm_to_vmem [thread:$0]  %s19, 512, %s21, [#allocation3], 256, 256, 16
    $region5: #{tpu_custom_call.1} parent=1 // pred_fallthru
      _
    // Predicated region
    $region6: #{tpu_custom_call.1} parent=1 // pred_check
      _
    $region7: #{tpu_custom_call.1} parent=1 // pred_check_branch
      %28 = sbr.rel (0) target = $region9
    $region8: #{tpu_custom_call.1} parent=1 // pred_region
      %30 = vsyncadd [#allocation6], 0
      %s31 = sshll.u32 %s1, 4
      %s32 = int_to_ptr.hbm [resolvable:$true] %s31
      %s33 = sshll.u32 [#allocation5], 4
      %s34 = int_to_ptr.vmem [resolvable:$true] %s33
      %39 = dma.hbm_to_vmem [thread:$0]  %s32, 1024, %s34, [#allocation6], 512, 512, 32
    $region9: #{tpu_custom_call.1} parent=1 // pred_fallthru
      _
    // Predicated region
    $region10: #{tpu_custom_call.1} parent=1 // pred_check
      _
    $region11: #{tpu_custom_call.1} parent=1 // pred_check_branch
      %41 = sbr.rel (0) target = $region13
    $region12: #{tpu_custom_call.1} parent=1 // pred_region
      _
    $region13: #{tpu_custom_call.1} parent=1 // pred_fallthru
      _
    // Predicated region
    $region14: #{tpu_custom_call.1} parent=1 // pred_check
      _
    $region15: #{tpu_custom_call.1} parent=1 // pred_check_branch
      %43 = sbr.rel (0) target = $region17
    $region16: #{tpu_custom_call.1} parent=1 // pred_region
      _
    $region17: #{tpu_custom_call.1} parent=1 // pred_fallthru
      _
    // Predicated region
    $region18: #{tpu_custom_call.1} parent=1 // pred_check
      _
    $region19: #{tpu_custom_call.1} parent=1 // pred_check_branch
      %45 = sbr.rel (0) target = $region21
    $region20: #{tpu_custom_call.1} parent=1 // pred_region
      _
    $region21: #{tpu_custom_call.1} parent=1 // pred_fallthru
      _
    // Predicated region
    $region22: #{tpu_custom_call.1} parent=1 // pred_check
      _
    $region23: #{tpu_custom_call.1} parent=1 // pred_check_branch
      %47 = sbr.rel (0) target = $region25
    $region24: #{tpu_custom_call.1} parent=1 // pred_region
      _
    $region25: #{tpu_custom_call.1} parent=1 // pred_fallthru
      _
    // Predicated region
    $region26: #{tpu_custom_call.1} parent=1 // pred_check
      _
    $region27: #{tpu_custom_call.1} parent=1 // pred_check_branch
      %49 = sbr.rel (0) target = $region29
    $region28: #{tpu_custom_call.1} parent=1 // pred_region
      %51 = dma.done [#allocation3], 512
    $region29: #{tpu_custom_call.1} parent=1 // pred_fallthru
      _
    // Predicated region
    $region30: #{tpu_custom_call.1} parent=1 // pred_check
      _
    $region31: #{tpu_custom_call.1} parent=1 // pred_check_branch
      %53 = sbr.rel (0) target = $region33
    $region32: #{tpu_custom_call.1} parent=1 // pred_region
      %55 = dma.done [#allocation6], 1024
    $region33: #{tpu_custom_call.1} parent=1 // pred_fallthru
      _
    %v56 = vld [vmem:[#allocation5] sm:$0xff]
    %v57 = vld [vmem:[#allocation5 + $0x8] sm:$0xff]
    %v58 = vld [vmem:[#allocation5 + $0x10] sm:$0xff]
    %v59 = vld [vmem:[#allocation5 + $0x18] sm:$0xff]
    %v60 = vld [vmem:[#allocation5 + $0x20] sm:$0x1]
    %v61 = vld [vmem:[#allocation5 + $0x28] sm:$0x1]
    %v62 = vld [vmem:[#allocation5 + $0x30] sm:$0x1]
    %v63 = vld [vmem:[#allocation5 + $0x38] sm:$0x1]
    %v64 = vld [vmem:[%s2] sm:$0xff]
    %v65 = vld [vmem:[%s4] sm:$0xff]
    %v66 = vld [vmem:[%s3] sm:$0xff]
    %v67 = vld [vmem:[%s5] sm:$0xff]
    %v68 = vld [vmem:[#allocation2] sm:$0xff]
    %v69 = vld [vmem:[#allocation2 + $0x8] sm:$0xff]
    %s70 = scalar_lea.vmem [#allocation2], 16
    %v71 = vld [vmem:[%s70] sm:$0xff]
    %v72 = vld [vmem:[%s70 + $0x8] sm:$0xff]
    %73 = vrot.lane.b32.xlu0 %v68, 17
    %v74 = vpop.permute.xlu0 %73
    %75 = vrot.lane.b32.xlu0 %v69, 17
    %v76 = vpop.permute.xlu0 %75
    %77 = vrot.lane.b32.xlu0 %v71, 17
    %v78 = vpop.permute.xlu0 %77
    %79 = vrot.lane.b32.xlu0 %v72, 17
    %v80 = vpop.permute.xlu0 %79
    %v81 = vlaneseq
    %v82 = vand.u32 %v81, 127
    %vm83 = vcmp.lt.s32.totalorder %v82, 17
    %v84 = vsel %vm83, %v78, %v80
    %v85 = vsel %vm83, %v76, %v78
    %v86 = vsel %vm83, %v74, %v76
    %v87 = vsel %vm83, %v80, %v74
    %v88 = vperm.slane %v56, 0
    %v89 = vperm.slane %v57, 0
    %v90 = vperm.slane %v58, 0
    %v91 = vperm.slane %v59, 0
    %v92 = vmul.f32 %v87, %v88
    %v93 = vmul.f32 %v86, %v89
    %v94 = vmul.f32 %v85, %v90
    %v95 = vmul.f32 %v84, %v91
    %96 = vrot.lane.b32.xlu0 %v68, 16
    %v97 = vpop.permute.xlu0 %96
    %98 = vrot.lane.b32.xlu0 %v69, 16
    %v99 = vpop.permute.xlu0 %98
    %100 = vrot.lane.b32.xlu0 %v71, 16
    %v101 = vpop.permute.xlu0 %100
    %102 = vrot.lane.b32.xlu0 %v72, 16
    %v103 = vpop.permute.xlu0 %102
    %vm104 = vcmp.lt.s32.totalorder %v82, 16
    %v105 = vsel %vm104, %v101, %v103
    %v106 = vsel %vm104, %v99, %v101
    %v107 = vsel %vm104, %v97, %v99
    %v108 = vsel %vm104, %v103, %v97
    %v109 = vperm.slane %v56, 1
    %v110 = vperm.slane %v57, 1
    %v111 = vperm.slane %v58, 1
    %v112 = vperm.slane %v59, 1
    %v113 = vmul.f32 %v108, %v109
    %v114 = vmul.f32 %v107, %v110
    %v115 = vmul.f32 %v106, %v111
    %v116 = vmul.f32 %v105, %v112
    %117 = vrot.lane.b32.xlu0 %v68, 15
    %v118 = vpop.permute.xlu0 %117
    %119 = vrot.lane.b32.xlu0 %v69, 15
    %v120 = vpop.permute.xlu0 %119
    %121 = vrot.lane.b32.xlu0 %v71, 15
    %v122 = vpop.permute.xlu0 %121
    %123 = vrot.lane.b32.xlu0 %v72, 15
    %v124 = vpop.permute.xlu0 %123
    %vm125 = vcmp.lt.s32.totalorder %v82, 15
    %v126 = vsel %vm125, %v122, %v124
    %v127 = vsel %vm125, %v120, %v122
    %v128 = vsel %vm125, %v118, %v120
    %v129 = vsel %vm125, %v124, %v118
    %v130 = vperm.slane %v56, 2
    %v131 = vperm.slane %v57, 2
    %v132 = vperm.slane %v58, 2
    %v133 = vperm.slane %v59, 2
    %v134 = vmul.f32 %v129, %v130
    %v135 = vmul.f32 %v128, %v131
    %v136 = vmul.f32 %v127, %v132
    %v137 = vmul.f32 %v126, %v133
    %138 = vrot.lane.b32.xlu0 %v68, 1
    %v139 = vpop.permute.xlu0 %138
    %140 = vrot.lane.b32.xlu0 %v69, 1
    %v141 = vpop.permute.xlu0 %140
    %142 = vrot.lane.b32.xlu0 %v71, 1
    %v143 = vpop.permute.xlu0 %142
    %144 = vrot.lane.b32.xlu0 %v72, 1
    %v145 = vpop.permute.xlu0 %144
    %vm146 = vcmp.lt.s32.totalorder %v82, 1
    %v147 = vsel %vm146, %v143, %v145
    %v148 = vsel %vm146, %v141, %v143
    %v149 = vsel %vm146, %v139, %v141
    %v150 = vsel %vm146, %v145, %v139
    %v151 = vperm.slane %v56, 3
    %v152 = vperm.slane %v57, 3
    %v153 = vperm.slane %v58, 3
    %v154 = vperm.slane %v59, 3
    %v155 = vmul.f32 %v150, %v151
    %v156 = vmul.f32 %v149, %v152
    %v157 = vmul.f32 %v148, %v153
    %v158 = vmul.f32 %v147, %v154
    %159 = vrot.lane.b32.xlu0 %v68, 127
    %v160 = vpop.permute.xlu0 %159
    %161 = vrot.lane.b32.xlu0 %v69, 127
    %v162 = vpop.permute.xlu0 %161
    %163 = vrot.lane.b32.xlu0 %v71, 127
    %v164 = vpop.permute.xlu0 %163
    %165 = vrot.lane.b32.xlu0 %v72, 127
    %v166 = vpop.permute.xlu0 %165
    %vm167 = vcmp.lt.s32.totalorder %v82, 127
    %v168 = vsel %vm167, %v164, %v166
    %v169 = vsel %vm167, %v162, %v164
    %v170 = vsel %vm167, %v160, %v162
    %v171 = vsel %vm167, %v166, %v160
    %v172 = vperm.slane %v56, 5
    %v173 = vperm.slane %v57, 5
    %v174 = vperm.slane %v58, 5
    %v175 = vperm.slane %v59, 5
    %v176 = vmul.f32 %v170, %v172
    %v177 = vmul.f32 %v169, %v173
    %v178 = vmul.f32 %v168, %v174
    %v179 = vmul.f32 %v171, %v175
    %180 = vrot.lane.b32.xlu0 %v68, 113
    %v181 = vpop.permute.xlu0 %180
    %182 = vrot.lane.b32.xlu0 %v69, 113
    %v183 = vpop.permute.xlu0 %182
    %184 = vrot.lane.b32.xlu0 %v71, 113
    %v185 = vpop.permute.xlu0 %184
    %186 = vrot.lane.b32.xlu0 %v72, 113
    %v187 = vpop.permute.xlu0 %186
    %vm188 = vcmp.lt.s32.totalorder %v82, 113
    %v189 = vsel %vm188, %v185, %v187
    %v190 = vsel %vm188, %v183, %v185
    %v191 = vsel %vm188, %v181, %v183
    %v192 = vsel %vm188, %v187, %v181
    %v193 = vperm.slane %v56, 6
    %v194 = vperm.slane %v57, 6
    %v195 = vperm.slane %v58, 6
    %v196 = vperm.slane %v59, 6
    %v197 = vmul.f32 %v191, %v193
    %v198 = vmul.f32 %v190, %v194
    %v199 = vmul.f32 %v189, %v195
    %v200 = vmul.f32 %v192, %v196
    %201 = vrot.lane.b32.xlu0 %v68, 112
    %v202 = vpop.permute.xlu0 %201
    %203 = vrot.lane.b32.xlu0 %v69, 112
    %v204 = vpop.permute.xlu0 %203
    %205 = vrot.lane.b32.xlu0 %v71, 112
    %v206 = vpop.permute.xlu0 %205
    %207 = vrot.lane.b32.xlu0 %v72, 112
    %v208 = vpop.permute.xlu0 %207
    %vm209 = vcmp.lt.s32.totalorder %v82, 112
    %v210 = vsel %vm209, %v206, %v208
    %v211 = vsel %vm209, %v204, %v206
    %v212 = vsel %vm209, %v202, %v204
    %v213 = vsel %vm209, %v208, %v202
    %v214 = vperm.slane %v56, 7
    %v215 = vperm.slane %v57, 7
    %v216 = vperm.slane %v58, 7
    %v217 = vperm.slane %v59, 7
    %v218 = vmul.f32 %v212, %v214
    %v219 = vmul.f32 %v211, %v215
    %v220 = vmul.f32 %v210, %v216
    %v221 = vmul.f32 %v213, %v217
    %222 = vrot.lane.b32.xlu0 %v68, 111
    %v223 = vpop.permute.xlu0 %222
    %224 = vrot.lane.b32.xlu0 %v69, 111
    %v225 = vpop.permute.xlu0 %224
    %226 = vrot.lane.b32.xlu0 %v71, 111
    %v227 = vpop.permute.xlu0 %226
    %228 = vrot.lane.b32.xlu0 %v72, 111
    %v229 = vpop.permute.xlu0 %228
    %vm230 = vcmp.lt.s32.totalorder %v82, 111
    %v231 = vsel %vm230, %v227, %v229
    %v232 = vsel %vm230, %v225, %v227
    %v233 = vsel %vm230, %v223, %v225
    %v234 = vsel %vm230, %v229, %v223
    %v235 = vperm.slane %v60, 0
    %v236 = vperm.slane %v61, 0
    %v237 = vperm.slane %v62, 0
    %v238 = vperm.slane %v63, 0
    %v239 = vmul.f32 %v233, %v235
    %v240 = vmul.f32 %v232, %v236
    %v241 = vmul.f32 %v231, %v237
    %v242 = vmul.f32 %v234, %v238
    %244 = vset.pattern.permute.xlu0 0
    %245 = vperm.xlu0 %244, %v66
    %v246 = vpop.permute.xlu0 %245
    %vm248 = vcmask 588800
    %v250 = vsel %vm248, %v64, 0
    %252 = vmatpush.msra.mxu0 0.0
    %253 = vmatpush.msra.mxu0 0.0
    %254 = vmatpush.msra.mxu0 0.0
    %255 = vmatpush.msra.mxu0 0.0
    %256 = vmatpush.msra.mxu0 0.0
    %257 = vmatpush.msra.mxu0 0.0
    %258 = vmatpush.msra.mxu0 0.0
    %259 = vmatpush.msra.mxu0 %v239
    %260 = vmatpush.msra.mxu0 %v218
    %261 = vmatpush.msra.mxu0 %v197
    %262 = vmatpush.msra.mxu0 %v176
    %263 = vmatpush.msra.mxu0 %v68
    %264 = vmatpush.msra.mxu0 %v155
    %265 = vmatpush.msra.mxu0 %v134
    %266 = vmatpush.msra.mxu0 %v113
    %267 = vmatpush.msra.mxu0 %v92
    %268 = vmatmul.f32.gmra.mxu0 %v250
    %v269 = vpop.f32.mrf.mxu0
    %v270 = vadd.f32 %v246, %v269
    %271 = vdwg.mxu0
    %272 = vmatpush.msra.mxu0 0.0
    %273 = vmatpush.msra.mxu0 0.0
    %274 = vmatpush.msra.mxu0 0.0
    %275 = vmatpush.msra.mxu0 0.0
    %276 = vmatpush.msra.mxu0 0.0
    %277 = vmatpush.msra.mxu0 0.0
    %278 = vmatpush.msra.mxu0 0.0
    %279 = vmatpush.msra.mxu0 %v240
    %280 = vmatpush.msra.mxu0 %v219
    %281 = vmatpush.msra.mxu0 %v198
    %282 = vmatpush.msra.mxu0 %v177
    %283 = vmatpush.msra.mxu0 %v69
    %284 = vmatpush.msra.mxu0 %v156
    %285 = vmatpush.msra.mxu0 %v135
    %286 = vmatpush.msra.mxu0 %v114
    %287 = vmatpush.msra.mxu0 %v93
    %288 = vmatmul.f32.gmra.mxu0 %v250
    %v289 = vpop.f32.mrf.mxu0
    %v290 = vadd.f32 %v246, %v289
    %291 = vdwg.mxu0
    %292 = vmatpush.msra.mxu0 0.0
    %293 = vmatpush.msra.mxu0 0.0
    %294 = vmatpush.msra.mxu0 0.0
    %295 = vmatpush.msra.mxu0 0.0
    %296 = vmatpush.msra.mxu0 0.0
    %297 = vmatpush.msra.mxu0 0.0
    %298 = vmatpush.msra.mxu0 0.0
    %299 = vmatpush.msra.mxu0 %v241
    %300 = vmatpush.msra.mxu0 %v220
    %301 = vmatpush.msra.mxu0 %v199
    %302 = vmatpush.msra.mxu0 %v178
    %303 = vmatpush.msra.mxu0 %v71
    %304 = vmatpush.msra.mxu0 %v157
    %305 = vmatpush.msra.mxu0 %v136
    %306 = vmatpush.msra.mxu0 %v115
    %307 = vmatpush.msra.mxu0 %v94
    %308 = vmatmul.f32.gmra.mxu0 %v250
    %v309 = vpop.f32.mrf.mxu0
    %v310 = vadd.f32 %v246, %v309
    %311 = vdwg.mxu0
    %312 = vmatpush.msra.mxu0 0.0
    %313 = vmatpush.msra.mxu0 0.0
    %314 = vmatpush.msra.mxu0 0.0
    %315 = vmatpush.msra.mxu0 0.0
    %316 = vmatpush.msra.mxu0 0.0
    %317 = vmatpush.msra.mxu0 0.0
    %318 = vmatpush.msra.mxu0 0.0
    %319 = vmatpush.msra.mxu0 %v242
    %320 = vmatpush.msra.mxu0 %v221
    %321 = vmatpush.msra.mxu0 %v200
    %322 = vmatpush.msra.mxu0 %v179
    %323 = vmatpush.msra.mxu0 %v72
    %324 = vmatpush.msra.mxu0 %v158
    %325 = vmatpush.msra.mxu0 %v137
    %326 = vmatpush.msra.mxu0 %v116
    %327 = vmatpush.msra.mxu0 %v95
    %328 = vmatmul.f32.gmra.mxu0 %v250
    %v329 = vpop.f32.mrf.mxu0
    %v330 = vadd.f32 %v246, %v329
    %331 = vdwg.mxu0
    %v332 = vmax.f32 %v270, 0.0
    %v333 = vmax.f32 %v290, 0.0
    %v334 = vmax.f32 %v310, 0.0
    %v335 = vmax.f32 %v330, 0.0
    %336 = vrot.lane.b32.xlu0 %v332, 17
    %v337 = vpop.permute.xlu0 %336
    %338 = vrot.lane.b32.xlu0 %v333, 17
    %v339 = vpop.permute.xlu0 %338
    %340 = vrot.lane.b32.xlu0 %v334, 17
    %v341 = vpop.permute.xlu0 %340
    %342 = vrot.lane.b32.xlu0 %v335, 17
    %v343 = vpop.permute.xlu0 %342
    %v344 = vsel %vm83, %v341, %v343
    %v345 = vsel %vm83, %v339, %v341
    %v346 = vsel %vm83, %v337, %v339
    %v347 = vsel %vm83, %v343, %v337
    %v348 = vmul.f32 %v347, %v88
    %v349 = vmul.f32 %v346, %v89
    %v350 = vmul.f32 %v345, %v90
    %v351 = vmul.f32 %v344, %v91
    %352 = vrot.lane.b32.xlu0 %v332, 16
    %v353 = vpop.permute.xlu0 %352
    %354 = vrot.lane.b32.xlu0 %v333, 16
    %v355 = vpop.permute.xlu0 %354
    %356 = vrot.lane.b32.xlu0 %v334, 16
    %v357 = vpop.permute.xlu0 %356
    %358 = vrot.lane.b32.xlu0 %v335, 16
    %v359 = vpop.permute.xlu0 %358
    %v360 = vsel %vm104, %v357, %v359
    %v361 = vsel %vm104, %v355, %v357
    %v362 = vsel %vm104, %v353, %v355
    %v363 = vsel %vm104, %v359, %v353
    %v364 = vmul.f32 %v363, %v109
    %v365 = vmul.f32 %v362, %v110
    %v366 = vmul.f32 %v361, %v111
    %v367 = vmul.f32 %v360, %v112
    %368 = vrot.lane.b32.xlu0 %v332, 15
    %v369 = vpop.permute.xlu0 %368
    %370 = vrot.lane.b32.xlu0 %v333, 15
    %v371 = vpop.permute.xlu0 %370
    %372 = vrot.lane.b32.xlu0 %v334, 15
    %v373 = vpop.permute.xlu0 %372
    %374 = vrot.lane.b32.xlu0 %v335, 15
    %v375 = vpop.permute.xlu0 %374
    %v376 = vsel %vm125, %v373, %v375
    %v377 = vsel %vm125, %v371, %v373
    %v378 = vsel %vm125, %v369, %v371
    %v379 = vsel %vm125, %v375, %v369
    %v380 = vmul.f32 %v379, %v130
    %v381 = vmul.f32 %v378, %v131
    %v382 = vmul.f32 %v377, %v132
    %v383 = vmul.f32 %v376, %v133
    %384 = vrot.lane.b32.xlu0 %v332, 1
    %v385 = vpop.permute.xlu0 %384
    %386 = vrot.lane.b32.xlu0 %v333, 1
    %v387 = vpop.permute.xlu0 %386
    %388 = vrot.lane.b32.xlu0 %v334, 1
    %v389 = vpop.permute.xlu0 %388
    %390 = vrot.lane.b32.xlu0 %v335, 1
    %v391 = vpop.permute.xlu0 %390
    %v392 = vsel %vm146, %v389, %v391
    %v393 = vsel %vm146, %v387, %v389
    %v394 = vsel %vm146, %v385, %v387
    %v395 = vsel %vm146, %v391, %v385
    %v396 = vmul.f32 %v395, %v151
    %v397 = vmul.f32 %v394, %v152
    %v398 = vmul.f32 %v393, %v153
    %v399 = vmul.f32 %v392, %v154
    %400 = vrot.lane.b32.xlu0 %v332, 127
    %v401 = vpop.permute.xlu0 %400
    %402 = vrot.lane.b32.xlu0 %v333, 127
    %v403 = vpop.permute.xlu0 %402
    %404 = vrot.lane.b32.xlu0 %v334, 127
    %v405 = vpop.permute.xlu0 %404
    %406 = vrot.lane.b32.xlu0 %v335, 127
    %v407 = vpop.permute.xlu0 %406
    %v408 = vsel %vm167, %v405, %v407
    %v409 = vsel %vm167, %v403, %v405
    %v410 = vsel %vm167, %v401, %v403
    %v411 = vsel %vm167, %v407, %v401
    %v412 = vmul.f32 %v410, %v172
    %v413 = vmul.f32 %v409, %v173
    %v414 = vmul.f32 %v408, %v174
    %v415 = vmul.f32 %v411, %v175
    %416 = vrot.lane.b32.xlu0 %v332, 113
    %v417 = vpop.permute.xlu0 %416
    %418 = vrot.lane.b32.xlu0 %v333, 113
    %v419 = vpop.permute.xlu0 %418
    %420 = vrot.lane.b32.xlu0 %v334, 113
    %v421 = vpop.permute.xlu0 %420
    %422 = vrot.lane.b32.xlu0 %v335, 113
    %v423 = vpop.permute.xlu0 %422
    %v424 = vsel %vm188, %v421, %v423
    %v425 = vsel %vm188, %v419, %v421
    %v426 = vsel %vm188, %v417, %v419
    %v427 = vsel %vm188, %v423, %v417
    %v428 = vmul.f32 %v426, %v193
    %v429 = vmul.f32 %v425, %v194
    %v430 = vmul.f32 %v424, %v195
    %v431 = vmul.f32 %v427, %v196
    %432 = vrot.lane.b32.xlu0 %v332, 112
    %v433 = vpop.permute.xlu0 %432
    %434 = vrot.lane.b32.xlu0 %v333, 112
    %v435 = vpop.permute.xlu0 %434
    %436 = vrot.lane.b32.xlu0 %v334, 112
    %v437 = vpop.permute.xlu0 %436
    %438 = vrot.lane.b32.xlu0 %v335, 112
    %v439 = vpop.permute.xlu0 %438
    %v440 = vsel %vm209, %v437, %v439
    %v441 = vsel %vm209, %v435, %v437
    %v442 = vsel %vm209, %v433, %v435
    %v443 = vsel %vm209, %v439, %v433
    %v444 = vmul.f32 %v442, %v214
    %v445 = vmul.f32 %v441, %v215
    %v446 = vmul.f32 %v440, %v216
    %v447 = vmul.f32 %v443, %v217
    %448 = vrot.lane.b32.xlu0 %v332, 111
    %v449 = vpop.permute.xlu0 %448
    %450 = vrot.lane.b32.xlu0 %v333, 111
    %v451 = vpop.permute.xlu0 %450
    %452 = vrot.lane.b32.xlu0 %v334, 111
    %v453 = vpop.permute.xlu0 %452
    %454 = vrot.lane.b32.xlu0 %v335, 111
    %v455 = vpop.permute.xlu0 %454
    %v456 = vsel %vm230, %v453, %v455
    %v457 = vsel %vm230, %v451, %v453
    %v458 = vsel %vm230, %v449, %v451
    %v459 = vsel %vm230, %v455, %v449
    %v460 = vmul.f32 %v458, %v235
    %v461 = vmul.f32 %v457, %v236
    %v462 = vmul.f32 %v456, %v237
    %v463 = vmul.f32 %v459, %v238
    %465 = vset.pattern.permute.xlu0 0
    %466 = vperm.xlu0 %465, %v67
    %v467 = vpop.permute.xlu0 %466
    %v470 = vsel %vm248, %v65, 0
    %472 = vmatpush.msra.mxu0 0.0
    %473 = vmatpush.msra.mxu0 0.0
    %474 = vmatpush.msra.mxu0 0.0
    %475 = vmatpush.msra.mxu0 0.0
    %476 = vmatpush.msra.mxu0 0.0
    %477 = vmatpush.msra.mxu0 0.0
    %478 = vmatpush.msra.mxu0 0.0
    %479 = vmatpush.msra.mxu0 %v460
    %480 = vmatpush.msra.mxu0 %v444
    %481 = vmatpush.msra.mxu0 %v428
    %482 = vmatpush.msra.mxu0 %v412
    %483 = vmatpush.msra.mxu0 %v332
    %484 = vmatpush.msra.mxu0 %v396
    %485 = vmatpush.msra.mxu0 %v380
    %486 = vmatpush.msra.mxu0 %v364
    %487 = vmatpush.msra.mxu0 %v348
    %488 = vmatmul.f32.gmra.mxu0 %v470
    %v489 = vpop.f32.mrf.mxu0
    %v490 = vadd.f32 %v467, %v489
    %491 = vdwg.mxu0
    %492 = vmatpush.msra.mxu0 0.0
    %493 = vmatpush.msra.mxu0 0.0
    %494 = vmatpush.msra.mxu0 0.0
    %495 = vmatpush.msra.mxu0 0.0
    %496 = vmatpush.msra.mxu0 0.0
    %497 = vmatpush.msra.mxu0 0.0
    %498 = vmatpush.msra.mxu0 0.0
    %499 = vmatpush.msra.mxu0 %v461
    %500 = vmatpush.msra.mxu0 %v445
    %501 = vmatpush.msra.mxu0 %v429
    %502 = vmatpush.msra.mxu0 %v413
    %503 = vmatpush.msra.mxu0 %v333
    %504 = vmatpush.msra.mxu0 %v397
    %505 = vmatpush.msra.mxu0 %v381
    %506 = vmatpush.msra.mxu0 %v365
    %507 = vmatpush.msra.mxu0 %v349
    %508 = vmatmul.f32.gmra.mxu0 %v470
    %v509 = vpop.f32.mrf.mxu0
    %v510 = vadd.f32 %v467, %v509
    %511 = vdwg.mxu0
    %512 = vmatpush.msra.mxu0 0.0
    %513 = vmatpush.msra.mxu0 0.0
    %514 = vmatpush.msra.mxu0 0.0
    %515 = vmatpush.msra.mxu0 0.0
    %516 = vmatpush.msra.mxu0 0.0
    %517 = vmatpush.msra.mxu0 0.0
    %518 = vmatpush.msra.mxu0 0.0
    %519 = vmatpush.msra.mxu0 %v462
    %520 = vmatpush.msra.mxu0 %v446
    %521 = vmatpush.msra.mxu0 %v430
    %522 = vmatpush.msra.mxu0 %v414
    %523 = vmatpush.msra.mxu0 %v334
    %524 = vmatpush.msra.mxu0 %v398
    %525 = vmatpush.msra.mxu0 %v382
    %526 = vmatpush.msra.mxu0 %v366
    %527 = vmatpush.msra.mxu0 %v350
    %528 = vmatmul.f32.gmra.mxu0 %v470
    %v529 = vpop.f32.mrf.mxu0
    %v530 = vadd.f32 %v467, %v529
    %531 = vdwg.mxu0
    %532 = vmatpush.msra.mxu0 0.0
    %533 = vmatpush.msra.mxu0 0.0
    %534 = vmatpush.msra.mxu0 0.0
    %535 = vmatpush.msra.mxu0 0.0
    %536 = vmatpush.msra.mxu0 0.0
    %537 = vmatpush.msra.mxu0 0.0
    %538 = vmatpush.msra.mxu0 0.0
    %539 = vmatpush.msra.mxu0 %v463
    %540 = vmatpush.msra.mxu0 %v447
    %541 = vmatpush.msra.mxu0 %v431
    %542 = vmatpush.msra.mxu0 %v415
    %543 = vmatpush.msra.mxu0 %v335
    %544 = vmatpush.msra.mxu0 %v399
    %545 = vmatpush.msra.mxu0 %v383
    %546 = vmatpush.msra.mxu0 %v367
    %547 = vmatpush.msra.mxu0 %v351
    %548 = vmatmul.f32.gmra.mxu0 %v470
    %v549 = vpop.f32.mrf.mxu0
    %v550 = vadd.f32 %v467, %v549
    %551 = vdwg.mxu0
    %v552 = vmax.f32 %v490, 0.0
    %v553 = vmax.f32 %v510, 0.0
    %v554 = vmax.f32 %v530, 0.0
    %v555 = vmax.f32 %v550, 0.0
    %556 = vst [vmem:[#allocation7] sm:$0xff] %v552
    %557 = vst [vmem:[#allocation7 + $0x8] sm:$0xff] %v553
    %s558 = scalar_lea.vmem [#allocation7], 16
    %559 = vst [vmem:[%s558] sm:$0xff] %v554
    %560 = vst [vmem:[%s558 + $0x8] sm:$0xff] %v555
    // Predicated region
    $region34: #{tpu_custom_call.1} parent=1 // pred_check
      _
    $region35: #{tpu_custom_call.1} parent=1 // pred_check_branch
      %562 = sbr.rel (0) target = $region37
    $region36: #{tpu_custom_call.1} parent=1 // pred_region
      %564 = vsyncadd [#allocation4], 0
      %s565 = sshll.u32 [#allocation7], 4
      %s566 = int_to_ptr.vmem [resolvable:$true] %s565
      %s567 = sshll.u32 %s6, 4
      %s568 = int_to_ptr.hbm [resolvable:$true] %s567
      %573 = dma.vmem_to_hbm [thread:$0]  %s566, 512, %s568, [#allocation4], 256, 256, 16
    $region37: #{tpu_custom_call.1} parent=1 // pred_fallthru
      _
    // Predicated region
    $region38: #{tpu_custom_call.1} parent=1 // pred_check
      _
    $region39: #{tpu_custom_call.1} parent=1 // pred_check_branch
      %575 = sbr.rel (0) target = $region41
    $region40: #{tpu_custom_call.1} parent=1 // pred_region
      %577 = dma.done [#allocation4], 512
    $region41: #{tpu_custom_call.1} parent=1 // pred_fallthru
      _
    %578 = vsyncpa [#allocation3], 1
    %579 = vsyncpa [#allocation6], 1
    %580 = vsyncpa [#allocation4], 1

</llo_original>
